<compile_context>
chip_gen: v7x
topology: tpu7x:2x2x1
jax: 0.10.0
libtpu: 0.0.40
codegen_flags: <defaults>
</compile_context>

<pallas_src>
import jax
import jax.numpy as jnp
from jax.experimental import pallas as pl
from jax.experimental.pallas import tpu as pltpu


def film_block_kernel(x_ref, gb_ref, w1_ref, w2_ref, bias_ref, o_ref):
    """One (b_blk, tile_t, H) slab: fc1 -> SiLU -> FiLM affine -> fc2 -> +residual.

    Ref shapes:
      x_ref    : (b_blk, tile_t, H)  input dtype
      gb_ref   : (b_blk, 2, H) f32   [gamma; beta] per batch (precomputed in wrapper)
      w1_ref   : (H, H) bf16         fc1 weight, pre-transposed to (in, out)
      w2_ref   : (H, H) bf16         fc2 weight, pre-transposed to (in, out)
      bias_ref : (2, H) f32          [b1; b2]
      o_ref    : (b_blk, tile_t, H)
    """
    b_blk, tile_t, H = x_ref.shape
    rows = b_blk * tile_t

    x = x_ref[...]
    # Leading-dim merge (layout-free: tile_t is a multiple of 8 whenever b_blk > 1).
    x2 = x.reshape(rows, H)

    b1 = bias_ref[0:1, :]
    b2 = bias_ref[1:2, :]

    # fc1 on the MXU: bf16 operands, f32 accumulation.  SiLU in f32 (VPU + EUP).
    h = jnp.dot(x2.astype(jnp.bfloat16), w1_ref[...],
                preferred_element_type=jnp.float32) + b1
    h = h * jax.nn.sigmoid(h)

    # FiLM affine: per-batch (b_blk, 1, H) gamma/beta broadcast over time, f32.
    h = h.reshape(b_blk, tile_t, H)
    gamma = gb_ref[:, 0:1, :]
    beta = gb_ref[:, 1:2, :]
    h = gamma * h + beta

    # fc2 on the MXU + residual add in f32.
    out = jnp.dot(h.reshape(rows, H).astype(jnp.bfloat16), w2_ref[...],
                  preferred_element_type=jnp.float32) + b2
    out = out.reshape(b_blk, tile_t, H) + x.astype(jnp.float32)
    o_ref[...] = out.astype(o_ref.dtype)


def _choose_tiling(B, T, target_rows):
    """Pick (b_blk, tile_t) so each program feeds ~target_rows MXU rows while the
    grid keeps >= 2 programs (v7x megacore)."""
    if T >= target_rows:
        return 1, target_rows                      # tile over T, multiple of 8
    if B > 1:
        if T % 8 == 0:
            # Pack batches into the M dim, but keep >= 2 batch blocks.
            b_blk = max(1, min(target_rows // T, pl.cdiv(B, 2)))
            return b_blk, T
        return 1, T                                # full-T tile (legal: == full dim)
    # B == 1, short T: cheaply split T to give both v7x cores work.
    if T >= 16 and T % 16 == 0:
        return 1, T // 2
    return 1, T


def _vmem_bytes(b_blk, tile_t, H, x_itemsize, o_itemsize):
    """Rough VMEM footprint of the chosen tiling."""
    rows = b_blk * tile_t
    est = 2 * rows * H * x_itemsize            # x tile, double buffered
    est += 2 * rows * H * o_itemsize           # out tile, double buffered
    est += 2 * b_blk * 2 * H * 4               # gamma/beta block, double buffered
    est += 2 * H * H * 2                       # fc1 + fc2 weights (bf16), single buffered
    est += 2 * H * 4                           # stacked biases, single buffered
    est += 2 * rows * H * 4                    # f32 intermediates (h / out) headroom
    return est


def film_block(x, embedding, params, *, target_rows=256):
    """FiLMBlock forward.  x: (B, T, H), embedding: (B, E).
    Params follow the PyTorch Linear convention: weight is (out, in)."""
    B, T, H = x.shape

    # --- FiLM projections hoisted out of the grid: one batched GEMM each (f32) ---
    gamma = embedding.astype(jnp.float32) @ params["wg"].T.astype(jnp.float32) + params["bg"]
    beta = embedding.astype(jnp.float32) @ params["wb"].T.astype(jnp.float32) + params["bb"]
    gb = jnp.stack([gamma, beta], axis=1).astype(jnp.float32)      # (B, 2, H), one stream

    # fc weights: torch (out, in) -> (in, out), bf16 for the MXU.
    w1t = params["w1"].T.astype(jnp.bfloat16)
    w2t = params["w2"].T.astype(jnp.bfloat16)
    bias = jnp.stack([params["b1"], params["b2"]], axis=0).astype(jnp.float32)  # (2, H)

    # --- tiling + VMEM budget (fits v7x's 64 MiB physical with headroom) ---
    b_blk, tile_t = _choose_tiling(B, T, target_rows)
    vmem_budget = 40 * 1024 * 1024
    while _vmem_bytes(b_blk, tile_t, H, x.dtype.itemsize, x.dtype.itemsize) > vmem_budget:
        if b_blk > 1:
            b_blk = max(1, b_blk // 2)
        elif tile_t > 8 and tile_t % 16 == 0:
            tile_t //= 2
        else:
            break
    est = _vmem_bytes(b_blk, tile_t, H, x.dtype.itemsize, x.dtype.itemsize)
    vmem_limit = int(min(max(2 * est, 32 * 1024 * 1024), 64 * 1024 * 1024))

    grid = (pl.cdiv(B, b_blk), pl.cdiv(T, tile_t))   # ragged T: partial last tile is
                                                     # row-local, OOB writes dropped.

    const = dict(pipeline_mode=pl.Buffered(1))       # grid-constant blocks: 1 buffer

    out = pl.pallas_call(
        film_block_kernel,
        out_shape=jax.ShapeDtypeStruct((B, T, H), x.dtype),
        grid_spec=pltpu.PrefetchScalarGridSpec(
            num_scalar_prefetch=0,
            grid=grid,
            in_specs=[
                pl.BlockSpec((b_blk, tile_t, H), lambda b, t: (b, t, 0)),    # x
                pl.BlockSpec((b_blk, 2, H), lambda b, t: (b, 0, 0)),         # gamma/beta
                pl.BlockSpec((H, H), lambda b, t: (0, 0), **const),          # w1^T
                pl.BlockSpec((H, H), lambda b, t: (0, 0), **const),          # w2^T
                pl.BlockSpec((2, H), lambda b, t: (0, 0), **const),          # b1/b2
            ],
            out_specs=pl.BlockSpec((b_blk, tile_t, H), lambda b, t: (b, t, 0)),
        ),
        compiler_params=pltpu.CompilerParams(
            dimension_semantics=("parallel", "parallel"),
            vmem_limit_bytes=vmem_limit),
    )(x, gb, w1t, w2t, bias)
    return out


def film_block_ref(x, embedding, params):
    """Pure-f32 JAX reference matching the PyTorch forward."""
    h = x @ params["w1"].T + params["b1"]
    h = h * jax.nn.sigmoid(h)
    gamma = embedding @ params["wg"].T + params["bg"]
    beta = embedding @ params["wb"].T + params["bb"]
    h = gamma[:, None, :] * h + beta[:, None, :]
    return h @ params["w2"].T + params["b2"] + x


def film_block_ref_bf16(x, embedding, params):
    """Reference mirroring the kernel numerics (bf16 MXU operands, f32 accum)."""
    w1t = params["w1"].T.astype(jnp.bfloat16)
    w2t = params["w2"].T.astype(jnp.bfloat16)
    h = jnp.dot(x.astype(jnp.bfloat16), w1t,
                preferred_element_type=jnp.float32) + params["b1"]
    h = h * jax.nn.sigmoid(h)
    gamma = embedding @ params["wg"].T + params["bg"]
    beta = embedding @ params["wb"].T + params["bb"]
    h = gamma[:, None, :] * h + beta[:, None, :]
    out = jnp.dot(h.astype(jnp.bfloat16), w2t,
                  preferred_element_type=jnp.float32) + params["b2"]
    return out + x


if __name__ == "__main__":
    # Small shapes consistent with the module defaults (hidden_dim=64,
    # embedding_dim=256).  B=4, T=16 exercises the small-T batch-packing path
    # (b_blk=2 -> grid=(2, 1), 32 MXU rows per program).
    B, T, H, E = 4, 16, 64, 256

    key = jax.random.PRNGKey(0)
    keys = jax.random.split(key, 10)

    # PyTorch Linear convention: weight is (out, in).
    params = {
        "w1": jax.random.normal(keys[0], (H, H), jnp.float32) * 0.05,
        "b1": jax.random.normal(keys[1], (H,), jnp.float32) * 0.05,
        "wg": jax.random.normal(keys[2], (H, E), jnp.float32) * 0.05,
        "bg": jax.random.normal(keys[3], (H,), jnp.float32) * 0.05,
        "wb": jax.random.normal(keys[4], (H, E), jnp.float32) * 0.05,
        "bb": jax.random.normal(keys[5], (H,), jnp.float32) * 0.05,
        "w2": jax.random.normal(keys[6], (H, H), jnp.float32) * 0.05,
        "b2": jax.random.normal(keys[7], (H,), jnp.float32) * 0.05,
    }

    x = jax.random.normal(keys[8], (B, T, H), jnp.float32)
    embedding = jax.random.normal(keys[9], (B, E), jnp.float32)

    out = film_block(x, embedding, params)
    out = jax.block_until_ready(out)
    assert out.shape == (B, T, H)

    # Tight check against a reference with identical numerics (bf16 MXU operands).
    ref_bf16 = film_block_ref_bf16(x, embedding, params)
    assert jnp.allclose(out, ref_bf16, atol=2e-3, rtol=2e-3), \
        "mismatch vs bf16-matmul reference"

    # Looser check against the exact-f32 PyTorch semantics (bf16 operand
    # rounding in the two matmuls is the only difference).
    ref_f32 = film_block_ref(x, embedding, params)
    assert jnp.allclose(out, ref_f32, atol=5e-2, rtol=5e-2), \
        "mismatch vs f32 reference"

    print("KERNEL_OK")
</pallas_src>

<mosaic_0001>
module attributes {stable_mosaic.version = 11 : i64} {
  func.func @film_block_kernel(%arg0: i32, %arg1: i32, %arg2: memref<2x16x64xf32, #tpu.memory_space<vmem>>, %arg3: memref<2x2x64xf32, #tpu.memory_space<vmem>>, %arg4: memref<64x64xbf16, #tpu.memory_space<vmem>>, %arg5: memref<64x64xbf16, #tpu.memory_space<vmem>>, %arg6: memref<2x64xf32, #tpu.memory_space<vmem>>, %arg7: memref<2x16x64xf32, #tpu.memory_space<vmem>>) attributes {dimension_semantics = [#tpu.dimension_semantics<parallel>, #tpu.dimension_semantics<parallel>], iteration_bounds = array<i64: 2, 1>, scalar_prefetch = 0 : i64, scratch_operands = 0 : i64, tpu.core_type = #tpu.core_type<tc>, window_params = [{transform_indices = @transform_0, window_bounds = array<i64: 2, 16, 64>}, {transform_indices = @transform_1, window_bounds = array<i64: 2, 2, 64>}, {pipeline_mode = #tpu.pipeline_mode<synchronous>, transform_indices = @transform_2, window_bounds = array<i64: 64, 64>}, {pipeline_mode = #tpu.pipeline_mode<synchronous>, transform_indices = @transform_3, window_bounds = array<i64: 64, 64>}, {pipeline_mode = #tpu.pipeline_mode<synchronous>, transform_indices = @transform_4, window_bounds = array<i64: 2, 64>}, {transform_indices = @transform_5, window_bounds = array<i64: 2, 16, 64>}]} {
    %c0 = arith.constant 0 : index
    %c0_0 = arith.constant 0 : index
    %c0_1 = arith.constant 0 : index
    %0 = vector.load %arg2[%c0, %c0_0, %c0_1] : memref<2x16x64xf32, #tpu.memory_space<vmem>>, vector<2x16x64xf32>
    %1 = vector.shape_cast %0 : vector<2x16x64xf32> to vector<32x64xf32>
    %c0_2 = arith.constant 0 : index
    %c0_3 = arith.constant 0 : index
    %2 = vector.load %arg6[%c0_2, %c0_3] : memref<2x64xf32, #tpu.memory_space<vmem>>, vector<1x64xf32>
    %c1 = arith.constant 1 : index
    %c0_4 = arith.constant 0 : index
    %3 = vector.load %arg6[%c1, %c0_4] : memref<2x64xf32, #tpu.memory_space<vmem>>, vector<1x64xf32>
    %4 = arith.truncf %1 : vector<32x64xf32> to vector<32x64xbf16>
    %c0_5 = arith.constant 0 : index
    %c0_6 = arith.constant 0 : index
    %5 = vector.load %arg4[%c0_5, %c0_6] : memref<64x64xbf16, #tpu.memory_space<vmem>>, vector<64x64xbf16>
    %cst = arith.constant dense<0.000000e+00> : vector<32x64xf32>
    %6 = tpu.matmul %4, %5, %cst {dimension_numbers = #tpu.dot_dimension_numbers<[1], [0], [0], [1], [0, 0, 1, 1], [], []>} : vector<32x64xbf16>, vector<64x64xbf16>, vector<32x64xf32> -> vector<32x64xf32>
    %7 = vector.broadcast %2 : vector<1x64xf32> to vector<32x64xf32>
    %8 = arith.addf %6, %7 : vector<32x64xf32>
    %9 = arith.negf %8 : vector<32x64xf32>
    %10 = math.exp %9 : vector<32x64xf32>
    %cst_7 = arith.constant 1.000000e+00 : f32
    %11 = vector.broadcast %cst_7 : f32 to vector<32x64xf32>
    %12 = arith.addf %11, %10 : vector<32x64xf32>
    %13 = arith.divf %11, %12 : vector<32x64xf32>
    %14 = arith.mulf %8, %13 : vector<32x64xf32>
    %15 = vector.shape_cast %14 : vector<32x64xf32> to vector<2x16x64xf32>
    %c0_8 = arith.constant 0 : index
    %c0_9 = arith.constant 0 : index
    %c0_10 = arith.constant 0 : index
    %16 = vector.load %arg3[%c0_8, %c0_9, %c0_10] : memref<2x2x64xf32, #tpu.memory_space<vmem>>, vector<2x1x64xf32>
    %c0_11 = arith.constant 0 : index
    %c1_12 = arith.constant 1 : index
    %c0_13 = arith.constant 0 : index
    %17 = vector.load %arg3[%c0_11, %c1_12, %c0_13] : memref<2x2x64xf32, #tpu.memory_space<vmem>>, vector<2x1x64xf32>
    %18 = vector.broadcast %16 : vector<2x1x64xf32> to vector<2x16x64xf32>
    %19 = arith.mulf %18, %15 : vector<2x16x64xf32>
    %20 = vector.broadcast %17 : vector<2x1x64xf32> to vector<2x16x64xf32>
    %21 = arith.addf %19, %20 : vector<2x16x64xf32>
    %22 = vector.shape_cast %21 : vector<2x16x64xf32> to vector<32x64xf32>
    %23 = arith.truncf %22 : vector<32x64xf32> to vector<32x64xbf16>
    %c0_14 = arith.constant 0 : index
    %c0_15 = arith.constant 0 : index
    %24 = vector.load %arg5[%c0_14, %c0_15] : memref<64x64xbf16, #tpu.memory_space<vmem>>, vector<64x64xbf16>
    %cst_16 = arith.constant dense<0.000000e+00> : vector<32x64xf32>
    %25 = tpu.matmul %23, %24, %cst_16 {dimension_numbers = #tpu.dot_dimension_numbers<[1], [0], [0], [1], [0, 0, 1, 1], [], []>} : vector<32x64xbf16>, vector<64x64xbf16>, vector<32x64xf32> -> vector<32x64xf32>
    %26 = vector.broadcast %3 : vector<1x64xf32> to vector<32x64xf32>
    %27 = arith.addf %25, %26 : vector<32x64xf32>
    %28 = vector.shape_cast %27 : vector<32x64xf32> to vector<2x16x64xf32>
    %29 = arith.addf %28, %0 : vector<2x16x64xf32>
    %c0_17 = arith.constant 0 : index
    %c0_18 = arith.constant 0 : index
    %c0_19 = arith.constant 0 : index
    %30 = vector.load %arg7[%c0_17, %c0_18, %c0_19] : memref<2x16x64xf32, #tpu.memory_space<vmem>>, vector<2x16x64xf32>
    tpu.vector_store %arg7[%c0_17, %c0_18, %c0_19], %29 {strides = array<i32>} : memref<2x16x64xf32, #tpu.memory_space<vmem>>, vector<2x16x64xf32>,
    return
  }
  func.func @transform_0(%arg0: i32, %arg1: i32) -> (i32, i32, i32) {
    %c0_i32 = arith.constant 0 : i32
    %c0_i32_0 = arith.constant 0 : i32
    return %arg0, %arg1, %c0_i32 : i32, i32, i32
  }
  func.func @transform_1(%arg0: i32, %arg1: i32) -> (i32, i32, i32) {
    %c0_i32 = arith.constant 0 : i32
    %c0_i32_0 = arith.constant 0 : i32
    %c0_i32_1 = arith.constant 0 : i32
    return %arg0, %c0_i32, %c0_i32_0 : i32, i32, i32
  }
  func.func @transform_2(%arg0: i32, %arg1: i32) -> (i32, i32) {
    %c0_i32 = arith.constant 0 : i32
    %c0_i32_0 = arith.constant 0 : i32
    %c0_i32_1 = arith.constant 0 : i32
    return %c0_i32, %c0_i32_0 : i32, i32
  }
  func.func @transform_3(%arg0: i32, %arg1: i32) -> (i32, i32) {
    %c0_i32 = arith.constant 0 : i32
    %c0_i32_0 = arith.constant 0 : i32
    %c0_i32_1 = arith.constant 0 : i32
    return %c0_i32, %c0_i32_0 : i32, i32
  }
  func.func @transform_4(%arg0: i32, %arg1: i32) -> (i32, i32) {
    %c0_i32 = arith.constant 0 : i32
    %c0_i32_0 = arith.constant 0 : i32
    %c0_i32_1 = arith.constant 0 : i32
    return %c0_i32, %c0_i32_0 : i32, i32
  }
  func.func @transform_5(%arg0: i32, %arg1: i32) -> (i32, i32, i32) {
    %c0_i32 = arith.constant 0 : i32
    %c0_i32_0 = arith.constant 0 : i32
    return %arg0, %arg1, %c0_i32 : i32, i32, i32
  }
}

</mosaic_0001>

<llo_original>
// kernel: tpu_custom_call.1
$region0: #{tpu_custom_call.1}
  #allocation0 [shape = 'u32[]', space=smem, size = 0x4, offset = 0x4, fixed_abs, tag = 'smem constant byte address 0x4 - core index']
  #allocation1 [shape = 'u32[144,128]{1,0:T(1,128)}', space=vmem, size = 0x12000, scoped, tag = 'internal scratch']
  %s0 = inlined_call_operand.hbm [shape: f32[4,16,64], index: 0, kind: input, shape index: {}]
  %s1 = inlined_call_operand.hbm [shape: f32[4,2,64], index: 1, kind: input, shape index: {}]
  %s2 = inlined_call_operand.hbm [shape: bf16[64,64], index: 2, kind: input, shape index: {}]
  %s3 = inlined_call_operand.hbm [shape: bf16[64,64], index: 3, kind: input, shape index: {}]
  %s4 = inlined_call_operand.vmem [shape: f32[2,64], index: 4, kind: input, shape index: {}]
  %s5 = inlined_call_operand.hbm [shape: f32[4,16,64], index: 5, kind: output, shape index: {}]
  %s6 = sld [smem:[#allocation0]]
  $region69: #{tpu_custom_call.1} parent=0
    _
  %s8 = ssub.s32 1, %s6
  %s9 = scalar_select 0, %s8, %s6
  $region1: #{tpu_custom_call.1} parent=0
    #allocation2 [shape = 'u8[32768]{0}', space=vmem, size = 0x8000, scoped, tag = 'input window, operand 0']
    #allocation3 [shape = 's32[2]{0}', space=sflag, size = 0x8, scoped, tag = 'scoped memory for tpu_custom_call.1']
    #allocation4 [shape = 's32[2]{0}', space=sflag, size = 0x8, scoped, tag = 'scoped memory for tpu_custom_call.1']
    #allocation5 [shape = 'u8[4096]{0}', space=vmem, size = 0x1000, scoped, tag = 'input window, operand 1']
    #allocation6 [shape = 's32[2]{0}', space=sflag, size = 0x8, scoped, tag = 'scoped memory for tpu_custom_call.1']
    #allocation7 [shape = 'u8[16384]{0}', space=vmem, size = 0x4000, scoped, tag = 'input window, operand 2, single buffered']
    #allocation8 [shape = 'u8[16384]{0}', space=vmem, size = 0x4000, scoped, tag = 'input window, operand 3, single buffered']
    #allocation9 [shape = 's32[1]{0}', space=sflag, size = 0x4, scoped, tag = 'scoped memory for tpu_custom_call.1']
    #allocation10 [shape = 'u8[32768]{0}', space=vmem, size = 0x8000, scoped, tag = 'output window, operand 0']
    %10 = vsyncpa [#allocation3], 0
    %s11 = scalar_lea.sflag [#allocation3], 1
    %12 = vsyncpa %s11, 0
    %13 = vsyncpa [#allocation6], 0
    %s14 = scalar_lea.sflag [#allocation6], 1
    %15 = vsyncpa %s14, 0
    %16 = vsyncpa [#allocation9], 0
    %17 = vsyncpa [#allocation4], 0
    %s18 = scalar_lea.sflag [#allocation4], 1
    %19 = vsyncpa %s18, 0
    loop: start=0, step=1, limit=4
    $region2: #{tpu_custom_call.1} parent=1 // loop_pre_header
      _
    $region3: #{tpu_custom_call.1} parent=1 // loop_header
      %s21 = sphi 0, %s25
      %p22 = scmp.ge.s32.totalorder %s21, 4
      %s28 = sphi 0, %s40
      %s29 = sphi 0, %s36
      %s30 = sphi 0, %s28
      %s31 = sphi 0, %s29
      %s32 = sphi 0, %s30
      %s33 = sphi 0, %s31
      %s45 = sphi 0, %s47
      %s48 = sphi 0, %s45
      %s49 = sphi 0, %s48
      %s65 = sphi 0, %s49
      %s71 = sphi 0, %s73
      %s74 = sphi 0, %s71
      %s75 = sphi 0, %s74
      %s91 = sphi 0, %s75
      %s95 = sphi 0, %s95
      %s97 = sphi 0, %s95
      %s98 = sphi 0, %s97
      %s112 = sphi 0, %s98
      %s116 = sphi 0, %s116
      %s118 = sphi 0, %s116
      %s119 = sphi 0, %s118
      %s133 = sphi 0, %s119
      %s137 = sphi 0, %s137
      %s139 = sphi 0, %s137
      %s140 = sphi 0, %s139
      %s154 = sphi 0, %s140
      %s162 = sphi 0, %s164
      %s165 = sphi 0, %s162
      %s166 = sphi 0, %s165
      %s182 = sphi 0, %s166
    $region4: #{tpu_custom_call.1} parent=1 // loop_header_branch
      %24 = sbr.rel (%p22) target = $region8
    $region5: #{tpu_custom_call.1} parent=1 // loop_body
      %s26 = ssub.s32 %s21, 1
      %s27 = ssub.s32 %s21, 2
      %s34 = sadd.s32 1, %s29
      %p35 = scmp.ge.s32.totalorder %s34, 1
      %s36 = scalar_select %p35, 0, %s34
      %s37 = sadd.s32 1, %s28
      %s38 = scalar_select %p35, %s37, %s28
      %p39 = scmp.ge.s32.totalorder %s38, 2
      %s40 = scalar_select %p39, 0, %s38
      %s41 = ssub.s32 %s28, %s40
      %s42 = ssub.s32 %s29, %s36
      %s43 = sor.u32 %s41, %s42
      %p44 = scmp.eq.s32.totalorder %s43, 0
      %s46 = sadd.s32 %s45, 1
      %s47 = scalar_select %p44, %s45, %s46
      %p50 = pneg %p44
      %p51 = scmp.eq.s32.totalorder %s21, 1
      %p52 = por %p50, %p51
      %p53 = scmp.ne.s32.totalorder %s45, %s48
      %p54 = scmp.eq.s32.totalorder %s21, 0
      %p55 = por %p53, %p54
      %p56 = scmp.ne.s32.totalorder %s45, %s48
      %p57 = scmp.eq.s32.totalorder %s26, 1
      %p58 = por %p56, %p57
      %p59 = scmp.ne.s32.totalorder %s48, %s49
      %p60 = scmp.eq.s32.totalorder %s26, 0
      %p61 = por %p59, %p60
      %p62 = scmp.ne.s32.totalorder %s48, %s49
      %p63 = scmp.eq.s32.totalorder %s27, 1
      %p64 = por %p62, %p63
      %p66 = scmp.ne.s32.totalorder %s49, %s65
      %p67 = scmp.eq.s32.totalorder %s27, 0
      %p68 = por %p66, %p67
      %s69 = ssub.s32 %s28, %s40
      %p70 = scmp.eq.s32.totalorder %s69, 0
      %s72 = sadd.s32 %s71, 1
      %s73 = scalar_select %p70, %s71, %s72
      %p76 = pneg %p70
      %p77 = scmp.eq.s32.totalorder %s21, 1
      %p78 = por %p76, %p77
      %p79 = scmp.ne.s32.totalorder %s71, %s74
      %p80 = scmp.eq.s32.totalorder %s21, 0
      %p81 = por %p79, %p80
      %p82 = scmp.ne.s32.totalorder %s71, %s74
      %p83 = scmp.eq.s32.totalorder %s26, 1
      %p84 = por %p82, %p83
      %p85 = scmp.ne.s32.totalorder %s74, %s75
      %p86 = scmp.eq.s32.totalorder %s26, 0
      %p87 = por %p85, %p86
      %p88 = scmp.ne.s32.totalorder %s74, %s75
      %p89 = scmp.eq.s32.totalorder %s27, 1
      %p90 = por %p88, %p89
      %p92 = scmp.ne.s32.totalorder %s75, %s91
      %p93 = scmp.eq.s32.totalorder %s27, 0
      %p94 = por %p92, %p93
      %s96 = sadd.s32 %s95, 1
      %p99 = scmp.eq.s32.totalorder %s21, 1
      %p100 = scmp.ne.s32.totalorder %s95, %s97
      %p101 = scmp.eq.s32.totalorder %s21, 0
      %p102 = por %p100, %p101
      %p103 = scmp.ne.s32.totalorder %s95, %s97
      %p104 = scmp.eq.s32.totalorder %s26, 1
      %p105 = por %p103, %p104
      %p106 = scmp.ne.s32.totalorder %s97, %s98
      %p107 = scmp.eq.s32.totalorder %s26, 0
      %p108 = por %p106, %p107
      %p109 = scmp.ne.s32.totalorder %s97, %s98
      %p110 = scmp.eq.s32.totalorder %s27, 1
      %p111 = por %p109, %p110
      %p113 = scmp.ne.s32.totalorder %s98, %s112
      %p114 = scmp.eq.s32.totalorder %s27, 0
      %p115 = por %p113, %p114
      %s117 = sadd.s32 %s116, 1
      %p120 = scmp.eq.s32.totalorder %s21, 1
      %p121 = scmp.ne.s32.totalorder %s116, %s118
      %p122 = scmp.eq.s32.totalorder %s21, 0
      %p123 = por %p121, %p122
      %p124 = scmp.ne.s32.totalorder %s116, %s118
      %p125 = scmp.eq.s32.totalorder %s26, 1
      %p126 = por %p124, %p125
      %p127 = scmp.ne.s32.totalorder %s118, %s119
      %p128 = scmp.eq.s32.totalorder %s26, 0
      %p129 = por %p127, %p128
      %p130 = scmp.ne.s32.totalorder %s118, %s119
      %p131 = scmp.eq.s32.totalorder %s27, 1
      %p132 = por %p130, %p131
      %p134 = scmp.ne.s32.totalorder %s119, %s133
      %p135 = scmp.eq.s32.totalorder %s27, 0
      %p136 = por %p134, %p135
      %s138 = sadd.s32 %s137, 1
      %p141 = scmp.eq.s32.totalorder %s21, 1
      %p142 = scmp.ne.s32.totalorder %s137, %s139
      %p143 = scmp.eq.s32.totalorder %s21, 0
      %p144 = por %p142, %p143
      %p145 = scmp.ne.s32.totalorder %s137, %s139
      %p146 = scmp.eq.s32.totalorder %s26, 1
      %p147 = por %p145, %p146
      %p148 = scmp.ne.s32.totalorder %s139, %s140
      %p149 = scmp.eq.s32.totalorder %s26, 0
      %p150 = por %p148, %p149
      %p151 = scmp.ne.s32.totalorder %s139, %s140
      %p152 = scmp.eq.s32.totalorder %s27, 1
      %p153 = por %p151, %p152
      %p155 = scmp.ne.s32.totalorder %s140, %s154
      %p156 = scmp.eq.s32.totalorder %s27, 0
      %p157 = por %p155, %p156
      %s158 = ssub.s32 %s28, %s40
      %s159 = ssub.s32 %s29, %s36
      %s160 = sor.u32 %s158, %s159
      %p161 = scmp.eq.s32.totalorder %s160, 0
      %s163 = sadd.s32 %s162, 1
      %s164 = scalar_select %p161, %s162, %s163
      %p167 = pneg %p161
      %p168 = scmp.eq.s32.totalorder %s21, 1
      %p169 = por %p167, %p168
      %p170 = scmp.ne.s32.totalorder %s162, %s165
      %p171 = scmp.eq.s32.totalorder %s21, 0
      %p172 = por %p170, %p171
      %p173 = scmp.ne.s32.totalorder %s162, %s165
      %p174 = scmp.eq.s32.totalorder %s26, 1
      %p175 = por %p173, %p174
      %p176 = scmp.ne.s32.totalorder %s165, %s166
      %p177 = scmp.eq.s32.totalorder %s26, 0
      %p178 = por %p176, %p177
      %p179 = scmp.ne.s32.totalorder %s165, %s166
      %p180 = scmp.eq.s32.totalorder %s27, 1
      %p181 = por %p179, %p180
      %p183 = scmp.ne.s32.totalorder %s166, %s182
      %p184 = scmp.eq.s32.totalorder %s27, 0
      %p185 = por %p183, %p184
      %p186 = scmp.le.s32.totalorder 1, %s21
      %p187 = scmp.lt.s32.totalorder %s21, 3
      %p188 = pnand %p186, %p187
      %p189 = pneg %p188
      // Predicated region
      $region9: #{tpu_custom_call.1} parent=5 // pred_check
        _
      $region10: #{tpu_custom_call.1} parent=5 // pred_check_branch
        %191 = sbr.rel (%p188) target = $region12
      $region11: #{tpu_custom_call.1} parent=5 // pred_region
        %s192 = ssub.s32 %s21, 1
        // Predicated region
        $region13: #{tpu_custom_call.1} parent=11 // pred_check
          %p193 = pneg %p108
        $region14: #{tpu_custom_call.1} parent=11 // pred_check_branch
          %195 = sbr.rel (%p193) target = $region16
        $region15: #{tpu_custom_call.1} parent=11 // pred_region
          %s197 = ssub.s32 512, 512
          %198 = vsyncadd [#allocation6], %s197
          %s199 = sshll.u32 [#allocation7], 4
          %s200 = int_to_ptr.vmem [resolvable:$true] %s199
          %205 = dma.hbm_to_vmem [thread:$0]  %s2, 512, %s200, [#allocation6], 64, 64, 4
        $region16: #{tpu_custom_call.1} parent=11 // pred_fallthru
          _
        // Predicated region
        $region17: #{tpu_custom_call.1} parent=11 // pred_check
          %p206 = pneg %p129
        $region18: #{tpu_custom_call.1} parent=11 // pred_check_branch
          %208 = sbr.rel (%p206) target = $region20
        $region19: #{tpu_custom_call.1} parent=11 // pred_region
          %s210 = ssub.s32 512, 512
          %211 = vsyncadd [#allocation9], %s210
          %s212 = sshll.u32 [#allocation8], 4
          %s213 = int_to_ptr.vmem [resolvable:$true] %s212
          %218 = dma.hbm_to_vmem [thread:$0]  %s3, 512, %s213, [#allocation9], 64, 64, 4
        $region20: #{tpu_custom_call.1} parent=11 // pred_fallthru
          _
        // Predicated region
        $region21: #{tpu_custom_call.1} parent=11 // pred_check
          %p219 = pneg %p150
        $region22: #{tpu_custom_call.1} parent=11 // pred_check_branch
          %221 = sbr.rel (%p219) target = $region24
        $region23: #{tpu_custom_call.1} parent=11 // pred_region
          _
        $region24: #{tpu_custom_call.1} parent=11 // pred_fallthru
          _
      $region12: #{tpu_custom_call.1} parent=5 // pred_fallthru
        _
      %p222 = scmp.lt.s32.totalorder %s21, 2
      // Predicated region
      $region25: #{tpu_custom_call.1} parent=5 // pred_check
        %p223 = pneg %p222
      $region26: #{tpu_custom_call.1} parent=5 // pred_check_branch
        %225 = sbr.rel (%p223) target = $region28
      $region27: #{tpu_custom_call.1} parent=5 // pred_region
        // Predicated region
        $region29: #{tpu_custom_call.1} parent=27 // pred_check
          %p226 = pneg %p55
        $region30: #{tpu_custom_call.1} parent=27 // pred_check_branch
          %228 = sbr.rel (%p226) target = $region32
        $region31: #{tpu_custom_call.1} parent=27 // pred_region
          %s229 = sand.u32 %s45, 1
          %s230 = scalar_lea.sflag [#allocation3], %s229
          %s231 = sand.u32 %s45, 1
          %s232 = smul.addr %s231, 32
          %s233 = scalar_lea.vmem [#allocation2], %s232
          %s234 = smul.u32 2, %s28
          %s235 = smul.u32 2, %s29
          %s237 = ssub.s32 512, 512
          %238 = vsyncadd %s230, %s237
          %s239 = smul.addr %s234, 2
          %s240 = sadd.s32 %s235, %s239
          %s241 = smul.addr %s240, 128
          %s242 = scalar_lea.hbm %s0, %s241
          %s243 = sshll.u32 %s233, 4
          %s244 = int_to_ptr.vmem [resolvable:$true] %s243
          %249 = dma.hbm_to_vmem [thread:$0]  %s242, 512, %s244, %s230, 128, 128, 8
        $region32: #{tpu_custom_call.1} parent=27 // pred_fallthru
          _
        // Predicated region
        $region33: #{tpu_custom_call.1} parent=27 // pred_check
          %p250 = pneg %p81
        $region34: #{tpu_custom_call.1} parent=27 // pred_check_branch
          %252 = sbr.rel (%p250) target = $region36
        $region35: #{tpu_custom_call.1} parent=27 // pred_region
          %s253 = sand.u32 %s21, 1
          %s254 = scalar_lea.sflag [#allocation6], %s253
          %s255 = sand.u32 %s71, 1
          %s256 = smul.addr %s255, 4
          %s257 = scalar_lea.vmem [#allocation5], %s256
          %s258 = smul.u32 2, %s28
          %s260 = ssub.s32 64, 64
          %261 = vsyncadd %s254, %s260
          %s262 = smul.addr %s258, 32
          %s263 = scalar_lea.hbm %s1, %s262
          %s264 = sshll.u32 %s257, 4
          %s265 = int_to_ptr.vmem [resolvable:$true] %s264
          %270 = dma.hbm_to_vmem [thread:$0]  %s263, 64, %s265, %s254, 32, 32, 2
        $region36: #{tpu_custom_call.1} parent=27 // pred_fallthru
          _
      $region28: #{tpu_custom_call.1} parent=5 // pred_fallthru
        _
      %p271 = scmp.le.s32.totalorder 1, %s21
      %p272 = scmp.lt.s32.totalorder %s21, 3
      %p273 = pnand %p271, %p272
      %p274 = pneg %p273
      // Predicated region
      $region37: #{tpu_custom_call.1} parent=5 // pred_check
        _
      $region38: #{tpu_custom_call.1} parent=5 // pred_check_branch
        %276 = sbr.rel (%p273) target = $region40
      $region39: #{tpu_custom_call.1} parent=5 // pred_region
        %s277 = ssub.s32 %s21, 1
        %s278 = sand.u32 %s48, 1
        %s279 = scalar_lea.sflag [#allocation3], %s278
        %s280 = sand.u32 %s48, 1
        %s281 = smul.addr %s280, 32
        %s282 = scalar_lea.vmem [#allocation2], %s281
        // Predicated region
        $region41: #{tpu_custom_call.1} parent=39 // pred_check
          %p283 = pneg %p61
        $region42: #{tpu_custom_call.1} parent=39 // pred_check_branch
          %285 = sbr.rel (%p283) target = $region44
        $region43: #{tpu_custom_call.1} parent=39 // pred_region
          %286 = dma.done %s279, 512
        $region44: #{tpu_custom_call.1} parent=39 // pred_fallthru
          _
        %s287 = sand.u32 %s26, 1
        %s288 = scalar_lea.sflag [#allocation6], %s287
        %s289 = sand.u32 %s74, 1
        %s290 = smul.addr %s289, 4
        %s291 = scalar_lea.vmem [#allocation5], %s290
        // Predicated region
        $region45: #{tpu_custom_call.1} parent=39 // pred_check
          %p292 = pneg %p87
        $region46: #{tpu_custom_call.1} parent=39 // pred_check_branch
          %294 = sbr.rel (%p292) target = $region48
        $region47: #{tpu_custom_call.1} parent=39 // pred_region
          %295 = dma.done %s288, 64
        $region48: #{tpu_custom_call.1} parent=39 // pred_fallthru
          _
        // Predicated region
        $region49: #{tpu_custom_call.1} parent=39 // pred_check
          %p296 = pneg %p108
        $region50: #{tpu_custom_call.1} parent=39 // pred_check_branch
          %298 = sbr.rel (%p296) target = $region52
        $region51: #{tpu_custom_call.1} parent=39 // pred_region
          %299 = dma.done [#allocation6], 512
        $region52: #{tpu_custom_call.1} parent=39 // pred_fallthru
          _
        // Predicated region
        $region53: #{tpu_custom_call.1} parent=39 // pred_check
          %p300 = pneg %p129
        $region54: #{tpu_custom_call.1} parent=39 // pred_check_branch
          %302 = sbr.rel (%p300) target = $region56
        $region55: #{tpu_custom_call.1} parent=39 // pred_region
          %303 = dma.done [#allocation9], 512
        $region56: #{tpu_custom_call.1} parent=39 // pred_fallthru
          _
        %s304 = sand.u32 %s48, 1
        %s305 = scalar_lea.sflag [#allocation3], %s304
        %s306 = sand.u32 %s48, 1
        %s307 = smul.addr %s306, 32
        %s308 = scalar_lea.vmem [#allocation2], %s307
        %p309 = pneg %p61
        %p310 = pneg %p58
        %s311 = sand.u32 %s26, 1
        %s312 = scalar_lea.sflag [#allocation6], %s311
        %s313 = sand.u32 %s74, 1
        %s314 = smul.addr %s313, 4
        %s315 = scalar_lea.vmem [#allocation5], %s314
        %p316 = pneg %p87
        %p317 = pneg %p84
        %p318 = pneg %p108
        %p319 = pneg %p105
        %p320 = pneg %p129
        %p321 = pneg %p126
        %p322 = pneg %p150
        %p323 = pneg %p147
        %p324 = pneg %p178
        %p325 = pneg %p175
        %s326 = sand.u32 %s165, 1
        %s327 = scalar_lea.sflag [#allocation4], %s326
        %s328 = sand.u32 %s165, 1
        %s329 = smul.addr %s328, 32
        %s330 = scalar_lea.vmem [#allocation10], %s329
        %s331 = smul.u32 2, %s30
        %s332 = smul.u32 2, %s31
        %s333 = smul.u32 2, %s30
        %s334 = smul.u32 2, %s30
        %s335 = smul.u32 2, %s31
        %v337 = vld [vmem:[%s282] sm:$0xff]
        %v338 = vld [vmem:[%s282 + $0x8] sm:$0xff]
        %v339 = vld [vmem:[%s282 + $0x10] sm:$0xff]
        %v340 = vld [vmem:[%s282 + $0x18] sm:$0xff]
        %v341 = vld [vmem:[%s4] sm:$0x1]
        %v342 = vld [vmem:[%s4 + $0x1] sm:$0x1]
        %v343 = vpack.c.bf16 %v338, %v337
        %v344 = vpack.c.bf16 %v340, %v339
        %v345 = vld [vmem:[#allocation7] sm:$0xf]
        %v346 = vld [vmem:[#allocation7 + $0x4] sm:$0xf]
        %v347 = vld [vmem:[#allocation7 + $0x8] sm:$0xf]
        %v348 = vld [vmem:[#allocation7 + $0xc] sm:$0xf]
        %v349 = vld [vmem:[#allocation7 + $0x10] sm:$0xf]
        %v350 = vld [vmem:[#allocation7 + $0x14] sm:$0xf]
        %v351 = vld [vmem:[#allocation7 + $0x18] sm:$0xf]
        %v352 = vld [vmem:[#allocation7 + $0x1c] sm:$0xf]
        %v353 = vlaneseq
        %v354 = vshrl.u32 %v353, 7
        %v355 = vsub.s32 0, %v354
        %v356 = vrot.slane %v341, %v355
        %v365 = vunpack.c.l.b16 %v345
        %v366 = vunpack.c.l.b16 %v346
        %v367 = vunpack.c.l.b16 %v347
        %v368 = vunpack.c.l.b16 %v348
        %v369 = vunpack.c.l.b16 %v349
        %v370 = vunpack.c.l.b16 %v350
        %v371 = vunpack.c.l.b16 %v351
        %v372 = vunpack.c.l.b16 %v352
        %v373 = vpack.c.b16 %v366, %v365
        %v374 = vpack.c.b16 %v368, %v367
        %v375 = vpack.c.b16 %v370, %v369
        %v376 = vpack.c.b16 %v372, %v371
        %vm381 = vcmask 523264
        %v383 = vsel %vm381, %v343, 0
        %v386 = vsel %vm381, %v344, 0
        %388 = vmatprep.subr.bf16.mxu0 0
        %389 = vmatpush1.bf16.msra.mxu0 %v373
        %390 = vmatprep.subr.bf16.mxu0 0
        %391 = vmatpush1.bf16.msra.mxu0 %v374
        %392 = vmatprep.subr.bf16.mxu0 0
        %393 = vmatpush1.bf16.msra.mxu0 %v375
        %394 = vmatprep.subr.bf16.mxu0 0
        %395 = vmatpush1.bf16.msra.mxu0 %v376
        %396 = vmatprep.subr.bf16.mxu0 0
        %397 = vmatpush1.bf16.msra.mxu0 0
        %398 = vmatprep.subr.bf16.mxu0 0
        %399 = vmatpush1.bf16.msra.mxu0 0
        %400 = vmatprep.subr.bf16.mxu0 0
        %401 = vmatpush1.bf16.msra.mxu0 0
        %402 = vmatprep.subr.bf16.mxu0 0
        %403 = vmatpush1.bf16.msra.mxu0 0
        %404 = vmatprep.subr.bf16.mxu0 0
        %405 = vmatpush1.bf16.msra.mxu0 0
        %406 = vmatprep.subr.bf16.mxu0 0
        %407 = vmatpush1.bf16.msra.mxu0 0
        %408 = vmatprep.subr.bf16.mxu0 0
        %409 = vmatpush1.bf16.msra.mxu0 0
        %410 = vmatprep.subr.bf16.mxu0 0
        %411 = vmatpush1.bf16.msra.mxu0 0
        %412 = vmatprep.subr.bf16.mxu0 0
        %413 = vmatpush1.bf16.msra.mxu0 0
        %414 = vmatprep.subr.bf16.mxu0 0
        %415 = vmatpush1.bf16.msra.mxu0 0
        %416 = vmatprep.subr.bf16.mxu0 0
        %417 = vmatpush1.bf16.msra.mxu0 0
        %418 = vmatprep.subr.bf16.mxu0 0
        %419 = vmatpush1.bf16.msra.mxu0 0
        %420 = vmatprep.mubr.bf16.mxu0 0
        %421 = vmatmul.mubr.bf16.gmra.mrb[0].mxu0 %v383
        %v422 = vpop.f32.mrb[0].mxu0
        %v423 = vadd.f32 %v356, %v422
        %v424 = vpop.f32.mrb[0].mxu0
        %v425 = vpop.f32.mrb[0].mxu0
        %v426 = vadd.f32 %v356, %v425
        %v427 = vpop.f32.mrb[0].mxu0
        %428 = vmatprep.mubr.bf16.mxu0 0
        %429 = vmatmul.mubr.bf16.gmra.mrb[0].mxu0 %v386
        %v430 = vpop.f32.mrb[0].mxu0
        %v431 = vadd.f32 %v356, %v430
        %v432 = vpop.f32.mrb[0].mxu0
        %v433 = vpop.f32.mrb[0].mxu0
        %v434 = vadd.f32 %v356, %v433
        %v435 = vpop.f32.mrb[0].mxu0
        %436 = vdwg.mxu0
        %v437 = vxor.u32 %v423, 2147483648
        %v438 = vxor.u32 %v426, 2147483648
        %v439 = vxor.u32 %v431, 2147483648
        %v440 = vxor.u32 %v434, 2147483648
        %v441 = vmul.f32 %v437, 1.442695
        %v442 = vpow.pop %v441
        %v443 = vmul.f32 %v438, 1.442695
        %v444 = vpow.pop %v443
        %v445 = vmul.f32 %v439, 1.442695
        %v446 = vpow.pop %v445
        %v447 = vmul.f32 %v440, 1.442695
        %v448 = vpow.pop %v447
        %v449 = vadd.f32 %v442, 1.0
        %v450 = vadd.f32 %v444, 1.0
        %v451 = vadd.f32 %v446, 1.0
        %v452 = vadd.f32 %v448, 1.0
        %v453 = vrcp.pop %v449
        %v454 = vmul.f32 1.0, %v453
        %v455 = vrcp.pop %v450
        %v456 = vmul.f32 1.0, %v455
        %v457 = vrcp.pop %v451
        %v458 = vmul.f32 1.0, %v457
        %v459 = vrcp.pop %v452
        %v460 = vmul.f32 1.0, %v459
        %v461 = vmul.f32 %v423, %v454
        %v462 = vmul.f32 %v426, %v456
        %v463 = vmul.f32 %v431, %v458
        %v464 = vmul.f32 %v434, %v460
        %v465 = vld [vmem:[%s291] sm:$0x1]
        %v466 = vld [vmem:[%s291 + $0x2] sm:$0x1]
        %v467 = vld [vmem:[%s291 + $0x1] sm:$0x1]
        %v468 = vld [vmem:[%s291 + $0x3] sm:$0x1]
        %v469 = vlaneseq
        %v470 = vshrl.u32 %v469, 7
        %v471 = vsub.s32 0, %v470
        %v472 = vrot.slane %v465, %v471
        %v473 = vlaneseq
        %v474 = vshrl.u32 %v473, 7
        %v475 = vsub.s32 0, %v474
        %v476 = vrot.slane %v466, %v475
        %v477 = vmul.f32 %v472, %v461
        %v478 = vmul.f32 %v472, %v462
        %v479 = vmul.f32 %v476, %v463
        %v480 = vmul.f32 %v476, %v464
        %v481 = vlaneseq
        %v482 = vshrl.u32 %v481, 7
        %v483 = vsub.s32 0, %v482
        %v484 = vrot.slane %v467, %v483
        %v485 = vlaneseq
        %v486 = vshrl.u32 %v485, 7
        %v487 = vsub.s32 0, %v486
        %v488 = vrot.slane %v468, %v487
        %v489 = vadd.f32 %v477, %v484
        %v490 = vadd.f32 %v478, %v484
        %v491 = vadd.f32 %v479, %v488
        %v492 = vadd.f32 %v480, %v488
        %v493 = vpack.c.bf16 %v490, %v489
        %v494 = vpack.c.bf16 %v492, %v491
        %v495 = vld [vmem:[#allocation8] sm:$0xf]
        %v496 = vld [vmem:[#allocation8 + $0x4] sm:$0xf]
        %v497 = vld [vmem:[#allocation8 + $0x8] sm:$0xf]
        %v498 = vld [vmem:[#allocation8 + $0xc] sm:$0xf]
        %v499 = vld [vmem:[#allocation8 + $0x10] sm:$0xf]
        %v500 = vld [vmem:[#allocation8 + $0x14] sm:$0xf]
        %v501 = vld [vmem:[#allocation8 + $0x18] sm:$0xf]
        %v502 = vld [vmem:[#allocation8 + $0x1c] sm:$0xf]
        %v503 = vlaneseq
        %v504 = vshrl.u32 %v503, 7
        %v505 = vsub.s32 0, %v504
        %v506 = vrot.slane %v342, %v505
        %v515 = vunpack.c.l.b16 %v495
        %v516 = vunpack.c.l.b16 %v496
        %v517 = vunpack.c.l.b16 %v497
        %v518 = vunpack.c.l.b16 %v498
        %v519 = vunpack.c.l.b16 %v499
        %v520 = vunpack.c.l.b16 %v500
        %v521 = vunpack.c.l.b16 %v501
        %v522 = vunpack.c.l.b16 %v502
        %v523 = vpack.c.b16 %v516, %v515
        %v524 = vpack.c.b16 %v518, %v517
        %v525 = vpack.c.b16 %v520, %v519
        %v526 = vpack.c.b16 %v522, %v521
        %v532 = vsel %vm381, %v493, 0
        %v535 = vsel %vm381, %v494, 0
        %537 = vmatprep.subr.bf16.mxu0 0
        %538 = vmatpush1.bf16.msra.mxu0 %v523
        %539 = vmatprep.subr.bf16.mxu0 0
        %540 = vmatpush1.bf16.msra.mxu0 %v524
        %541 = vmatprep.subr.bf16.mxu0 0
        %542 = vmatpush1.bf16.msra.mxu0 %v525
        %543 = vmatprep.subr.bf16.mxu0 0
        %544 = vmatpush1.bf16.msra.mxu0 %v526
        %545 = vmatprep.subr.bf16.mxu0 0
        %546 = vmatpush1.bf16.msra.mxu0 0
        %547 = vmatprep.subr.bf16.mxu0 0
        %548 = vmatpush1.bf16.msra.mxu0 0
        %549 = vmatprep.subr.bf16.mxu0 0
        %550 = vmatpush1.bf16.msra.mxu0 0
        %551 = vmatprep.subr.bf16.mxu0 0
        %552 = vmatpush1.bf16.msra.mxu0 0
        %553 = vmatprep.subr.bf16.mxu0 0
        %554 = vmatpush1.bf16.msra.mxu0 0
        %555 = vmatprep.subr.bf16.mxu0 0
        %556 = vmatpush1.bf16.msra.mxu0 0
        %557 = vmatprep.subr.bf16.mxu0 0
        %558 = vmatpush1.bf16.msra.mxu0 0
        %559 = vmatprep.subr.bf16.mxu0 0
        %560 = vmatpush1.bf16.msra.mxu0 0
        %561 = vmatprep.subr.bf16.mxu0 0
        %562 = vmatpush1.bf16.msra.mxu0 0
        %563 = vmatprep.subr.bf16.mxu0 0
        %564 = vmatpush1.bf16.msra.mxu0 0
        %565 = vmatprep.subr.bf16.mxu0 0
        %566 = vmatpush1.bf16.msra.mxu0 0
        %567 = vmatprep.subr.bf16.mxu0 0
        %568 = vmatpush1.bf16.msra.mxu0 0
        %569 = vmatprep.mubr.bf16.mxu0 0
        %570 = vmatmul.mubr.bf16.gmra.mrb[0].mxu0 %v532
        %v571 = vpop.f32.mrb[0].mxu0
        %v572 = vadd.f32 %v506, %v571
        %v573 = vpop.f32.mrb[0].mxu0
        %v574 = vpop.f32.mrb[0].mxu0
        %v575 = vadd.f32 %v506, %v574
        %v576 = vpop.f32.mrb[0].mxu0
        %577 = vmatprep.mubr.bf16.mxu0 0
        %578 = vmatmul.mubr.bf16.gmra.mrb[0].mxu0 %v535
        %v579 = vpop.f32.mrb[0].mxu0
        %v580 = vadd.f32 %v506, %v579
        %v581 = vpop.f32.mrb[0].mxu0
        %v582 = vpop.f32.mrb[0].mxu0
        %v583 = vadd.f32 %v506, %v582
        %v584 = vpop.f32.mrb[0].mxu0
        %585 = vdwg.mxu0
        %v586 = vadd.f32 %v572, %v337
        %v587 = vadd.f32 %v575, %v338
        %v588 = vadd.f32 %v580, %v339
        %v589 = vadd.f32 %v583, %v340
        %590 = vst.msk [vmem:[%s330] sm:$0xff] %vm381, %v586
        %591 = vst.msk [vmem:[%s330 + $0x8] sm:$0xff] %vm381, %v587
        %592 = vst.msk [vmem:[%s330 + $0x10] sm:$0xff] %vm381, %v588
        %593 = vst.msk [vmem:[%s330 + $0x18] sm:$0xff] %vm381, %v589
        %s594 = sand.u32 %s165, 1
        %s595 = scalar_lea.sflag [#allocation4], %s594
        %s596 = sand.u32 %s165, 1
        %s597 = smul.addr %s596, 32
        %s598 = scalar_lea.vmem [#allocation10], %s597
        // Predicated region
        $region57: #{tpu_custom_call.1} parent=39 // pred_check
          %p599 = pneg %p175
        $region58: #{tpu_custom_call.1} parent=39 // pred_check_branch
          %601 = sbr.rel (%p599) target = $region60
        $region59: #{tpu_custom_call.1} parent=39 // pred_region
          %s602 = smul.u32 2, %s30
          %s603 = smul.u32 2, %s31
          %s605 = ssub.s32 512, 512
          %606 = vsyncadd %s595, %s605
          %s607 = smul.addr %s602, 2
          %s608 = sadd.s32 %s603, %s607
          %s609 = smul.addr %s608, 128
          %s610 = scalar_lea.hbm %s5, %s609
          %s611 = sshll.u32 %s598, 4
          %s612 = int_to_ptr.vmem [resolvable:$true] %s611
          %617 = dma.vmem_to_hbm [thread:$0]  %s612, 512, %s610, %s595, 128, 128, 8
        $region60: #{tpu_custom_call.1} parent=39 // pred_fallthru
          _
      $region40: #{tpu_custom_call.1} parent=5 // pred_fallthru
        _
      %p618 = scmp.le.s32.totalorder 2, %s21
      // Predicated region
      $region61: #{tpu_custom_call.1} parent=5 // pred_check
        %p619 = pneg %p618
      $region62: #{tpu_custom_call.1} parent=5 // pred_check_branch
        %621 = sbr.rel (%p619) target = $region64
      $region63: #{tpu_custom_call.1} parent=5 // pred_region
        %s622 = ssub.s32 %s21, 2
        // Predicated region
        $region65: #{tpu_custom_call.1} parent=63 // pred_check
          %p623 = pneg %p181
        $region66: #{tpu_custom_call.1} parent=63 // pred_check_branch
          %625 = sbr.rel (%p623) target = $region68
        $region67: #{tpu_custom_call.1} parent=63 // pred_region
          %s626 = sand.u32 %s166, 1
          %s627 = scalar_lea.sflag [#allocation4], %s626
          %s628 = sand.u32 %s166, 1
          %s629 = smul.addr %s628, 32
          %s630 = scalar_lea.vmem [#allocation10], %s629
          %631 = dma.done %s627, 512
        $region68: #{tpu_custom_call.1} parent=63 // pred_fallthru
          _
      $region64: #{tpu_custom_call.1} parent=5 // pred_fallthru
        _
    $region6: #{tpu_custom_call.1} parent=1 // loop_footer
      %s25 = sadd.s32 1, %s21
    $region7: #{tpu_custom_call.1} parent=1 // loop_footer_branch
      %20 = sbr.rel target = $region3
    $region8: #{tpu_custom_call.1} parent=1 // loop_exit
      _
    %632 = vsyncpa [#allocation3], 1
    %s633 = scalar_lea.sflag [#allocation3], 1
    %634 = vsyncpa %s633, 1
    %635 = vsyncpa [#allocation6], 1
    %s636 = scalar_lea.sflag [#allocation6], 1
    %637 = vsyncpa %s636, 1
    %638 = vsyncpa [#allocation9], 1
    %639 = vsyncpa [#allocation4], 1
    %s640 = scalar_lea.sflag [#allocation4], 1
    %641 = vsyncpa %s640, 1

</llo_original>
